<compile_context>
chip_gen: v6e
topology: v6e:2x2x1
jax: 0.10.0
libtpu: 0.0.40
codegen_flags: <defaults>
</compile_context>

<pallas_src>
import math

import jax
import jax.numpy as jnp
from jax.experimental import pallas as pl
from jax.experimental.pallas import tpu as pltpu


def _round_up(v, m):
    return (v + m - 1) // m * m


# ----------------------------------------------------------------------------
# Pallas kernel: per-bit bf16 matmul + per-column f32 scale, accumulated
# directly into the resident f32 output block over the innermost `bits` axis.
# ----------------------------------------------------------------------------
def _bquant_kernel(x_ref, b_ref, s_ref, bias_ref, o_ref):
    k = pl.program_id(2)

    @pl.when(k == 0)
    def _init():
        o_ref[...] = jnp.zeros_like(o_ref)

    # x_ref: (tT, M) bf16; b_ref: (1, M, tN) int8; s_ref: (1, 1, tN) f32;
    # bias_ref: (1, tN) f32; o_ref: (tT, tN) f32 (resident accumulator).
    xb = jnp.dot(
        x_ref[...],
        b_ref[0].astype(x_ref.dtype),          # int8 -> bf16 in VMEM (cheap VPU)
        preferred_element_type=jnp.float32,    # f32 accumulation on the MXU
    )
    o_ref[...] += xb * s_ref[0]                # (tT, tN) * (1, tN) broadcast, f32

    @pl.when(k == pl.num_programs(2) - 1)
    def _finalize():
        o_ref[...] += bias_ref[...]


def bquant_conv1d_simple(x, binary, scale, bias, *, tile_t=256, tile_n=512):
    """Forward pass of BQuantConv1d_simple.

    x:      (..., M)        float (any float dtype; cast to bf16 for the MXU)
    binary: (bits, M, N)    int8 (values in {-1, +1})
    scale:  (bits, 1, N)    float32
    bias:   (N,)            float32
    returns (..., N)        float32
    """
    bits, M, N = binary.shape
    size_out = x.shape[:-1] + (N,)
    T = int(math.prod(x.shape[:-1]))

    # Tile sizes: multiples of (16, 128) (bf16 sublane packing / lane width),
    # capped at the target; pad T / N up to tile multiples.  M stays the full
    # contraction dim (block dim == full array dim, so no 128-divisibility
    # requirement).
    t_t = min(tile_t, _round_up(T, 16))
    t_n = min(tile_n, _round_up(N, 128))
    Tp = _round_up(T, t_t)
    Np = _round_up(N, t_n)

    x2d = x.reshape(T, M).astype(jnp.bfloat16)
    if Tp != T:
        x2d = jnp.pad(x2d, ((0, Tp - T), (0, 0)))

    b_i8 = binary.astype(jnp.int8)             # keep weights int8 in HBM
    s_f = scale.astype(jnp.float32)
    bias2d = bias.reshape(1, N).astype(jnp.float32)
    if Np != N:
        b_i8 = jnp.pad(b_i8, ((0, 0), (0, 0), (0, Np - N)))
        s_f = jnp.pad(s_f, ((0, 0), (0, 0), (0, Np - N)))
        bias2d = jnp.pad(bias2d, ((0, 0), (0, Np - N)))

    grid = (Tp // t_t, Np // t_n, bits)

    out = pl.pallas_call(
        _bquant_kernel,
        out_shape=jax.ShapeDtypeStruct((Tp, Np), jnp.float32),
        grid_spec=pltpu.PrefetchScalarGridSpec(
            num_scalar_prefetch=0,
            grid=grid,
            in_specs=[
                # x tile: constant across j, k (stays resident)
                pl.BlockSpec((t_t, M), lambda i, j, k: (i, 0)),
                # B_k tile: changes every grid step -> streamed / double-buffered.
                # (If profiling shows the DMA exposed, add
                #  pipeline_mode=pl.Buffered(3) here.)
                pl.BlockSpec((1, M, t_n), lambda i, j, k: (k, 0, j)),
                # per-bit, per-column scale
                pl.BlockSpec((1, 1, t_n), lambda i, j, k: (k, 0, j)),
                # bias (constant across bits)
                pl.BlockSpec((1, t_n), lambda i, j, k: (0, j)),
            ],
            # Same output block for every k -> resident f32 accumulator.
            out_specs=pl.BlockSpec((t_t, t_n), lambda i, j, k: (i, j)),
        ),
        compiler_params=pltpu.CompilerParams(
            dimension_semantics=("parallel", "parallel", "arbitrary"),
        ),
    )(x2d, b_i8, s_f, bias2d)

    return out[:T, :N].reshape(size_out)


# ----------------------------------------------------------------------------
# Deterministic parameter construction, mirroring BQuantConv1d_simple.__init__
# with method='sup', linear=False (weight shape (in_features, nf)).
# ----------------------------------------------------------------------------
def build_bquant_params(w0, bits):
    """w0: (M, N) float32 -> (binary:(bits,M,N) int8, scale:(bits,1,N) f32)."""
    w = w0
    scales = []
    binaries = []
    for _ in range(bits):
        absw = jnp.abs(w)
        sign = w > 0
        mini = jnp.min(absw, axis=0)
        maxi = jnp.max(absw, axis=0)
        s = (mini + maxi) / 2.0
        b = jnp.where(sign, 1, -1).astype(jnp.int8)
        scales.append(s)
        binaries.append(b)
        w = w - jnp.where(sign, s[None, :], -s[None, :])
    scale = jnp.stack(scales, axis=0)[:, None, :]      # (bits, 1, N)
    binary = jnp.stack(binaries, axis=0)               # (bits, M, N)
    return binary, scale


def reference_forward(x, binary, scale, bias):
    """Pure-JAX reference that mirrors the PyTorch forward op-for-op (f32)."""
    bits = binary.shape[0]
    nf = binary.shape[-1]
    size_out = x.shape[:-1] + (nf,)
    xr = x.reshape(1, -1, x.shape[-1])
    y = jnp.matmul(xr, binary.astype(x.dtype))                 # (bits, T, N)
    y = y * jnp.broadcast_to(scale, (bits, y.shape[1], nf))
    y = jnp.sum(y, axis=0)
    y = y + bias
    return y.reshape(size_out)


if __name__ == "__main__":
    key = jax.random.PRNGKey(0)
    kw, kb, kx = jax.random.split(key, 3)

    # Module hyper-params (small, consistent with the forward):
    batch, seq = 2, 8
    in_features, nf = 32, 64
    bits = 8

    # Deterministic GPT-2 Conv1D params: weight (in_features, nf), bias (nf,)
    w0 = jax.random.normal(kw, (in_features, nf), dtype=jnp.float32) * 0.02
    bias = jax.random.normal(kb, (nf,), dtype=jnp.float32) * 0.02
    binary, scale = build_bquant_params(w0, bits)

    x = jax.random.normal(kx, (batch, seq, in_features), dtype=jnp.float32)

    out = bquant_conv1d_simple(x, binary, scale, bias)
    out = jax.block_until_ready(out)
    assert out.shape == (batch, seq, nf)

    # Tight check: reference on bf16-rounded activations (the kernel feeds
    # bf16 x to the MXU; bf16 * {-1,+1} products are exact in f32, so only
    # f32 accumulation-order noise remains).
    x_bf = x.astype(jnp.bfloat16).astype(jnp.float32)
    ref_bf = reference_forward(x_bf, binary, scale, bias)
    assert jnp.allclose(out, ref_bf, atol=1e-4, rtol=1e-4)

    # Loose check against the full-precision f32 reference (bf16 activation
    # rounding bound).
    ref_f32 = reference_forward(x, binary, scale, bias)
    assert jnp.allclose(out, ref_f32, atol=1e-2, rtol=1e-2)

    print("KERNEL_OK")
</pallas_src>

<mosaic_0001>
module attributes {stable_mosaic.version = 11 : i64} {
  func.func @_bquant_kernel(%arg0: i32, %arg1: i32, %arg2: i32, %arg3: memref<16x32xbf16, #tpu.memory_space<vmem>>, %arg4: memref<1x32x128xi8, #tpu.memory_space<vmem>>, %arg5: memref<1x1x128xf32, #tpu.memory_space<vmem>>, %arg6: memref<1x128xf32, #tpu.memory_space<vmem>>, %arg7: memref<16x128xf32, #tpu.memory_space<vmem>>) attributes {dimension_semantics = [#tpu.dimension_semantics<parallel>, #tpu.dimension_semantics<parallel>, #tpu.dimension_semantics<arbitrary>], iteration_bounds = array<i64: 1, 1, 8>, scalar_prefetch = 0 : i64, scratch_operands = 0 : i64, tpu.core_type = #tpu.core_type<tc>, window_params = [{transform_indices = @transform_0, window_bounds = array<i64: 16, 32>}, {transform_indices = @transform_1, window_bounds = array<i64: 1, 32, 128>}, {transform_indices = @transform_2, window_bounds = array<i64: 1, 1, 128>}, {transform_indices = @transform_3, window_bounds = array<i64: 1, 128>}, {transform_indices = @transform_4, window_bounds = array<i64: 16, 128>}]} {
    %c0_i32 = arith.constant 0 : i32
    %0 = arith.cmpi eq, %arg2, %c0_i32 : i32
    %1 = arith.extui %0 : i1 to i32
    %c0_i32_0 = arith.constant 0 : i32
    %2 = arith.cmpi ne, %1, %c0_i32_0 : i32
    scf.if %2 {
      %cst_13 = arith.constant 0.000000e+00 : f32
      %18 = vector.broadcast %cst_13 : f32 to vector<16x128xf32>
      %c0_14 = arith.constant 0 : index
      %c0_15 = arith.constant 0 : index
      %19 = vector.load %arg7[%c0_14, %c0_15] : memref<16x128xf32, #tpu.memory_space<vmem>>, vector<16x128xf32>
      tpu.vector_store %arg7[%c0_14, %c0_15], %18 {strides = array<i32>} : memref<16x128xf32, #tpu.memory_space<vmem>>, vector<16x128xf32>,
    } else {
    }
    %c0 = arith.constant 0 : index
    %c0_1 = arith.constant 0 : index
    %3 = vector.load %arg3[%c0, %c0_1] : memref<16x32xbf16, #tpu.memory_space<vmem>>, vector<16x32xbf16>
    %c0_2 = arith.constant 0 : index
    %c0_3 = arith.constant 0 : index
    %c0_4 = arith.constant 0 : index
    %4 = vector.load %arg4[%c0_2, %c0_3, %c0_4] : memref<1x32x128xi8, #tpu.memory_space<vmem>>, vector<1x32x128xi8>
    %5 = vector.shape_cast %4 : vector<1x32x128xi8> to vector<32x128xi8>
    %6 = arith.sitofp %5 : vector<32x128xi8> to vector<32x128xbf16>
    %cst = arith.constant dense<0.000000e+00> : vector<16x128xf32>
    %7 = tpu.matmul %3, %6, %cst {dimension_numbers = #tpu.dot_dimension_numbers<[1], [0], [0], [1], [0, 0, 1, 1], [], []>} : vector<16x32xbf16>, vector<32x128xbf16>, vector<16x128xf32> -> vector<16x128xf32>
    %c0_5 = arith.constant 0 : index
    %c0_6 = arith.constant 0 : index
    %8 = vector.load %arg7[%c0_5, %c0_6] : memref<16x128xf32, #tpu.memory_space<vmem>>, vector<16x128xf32>
    %c0_7 = arith.constant 0 : index
    %c0_8 = arith.constant 0 : index
    %c0_9 = arith.constant 0 : index
    %9 = vector.load %arg5[%c0_7, %c0_8, %c0_9] : memref<1x1x128xf32, #tpu.memory_space<vmem>>, vector<1x1x128xf32>
    %10 = vector.shape_cast %9 : vector<1x1x128xf32> to vector<1x128xf32>
    %11 = vector.broadcast %10 : vector<1x128xf32> to vector<16x128xf32>
    %12 = arith.mulf %7, %11 : vector<16x128xf32>
    %13 = arith.addf %8, %12 : vector<16x128xf32>
    %c0_10 = arith.constant 0 : index
    %c0_11 = arith.constant 0 : index
    %14 = vector.load %arg7[%c0_10, %c0_11] : memref<16x128xf32, #tpu.memory_space<vmem>>, vector<16x128xf32>
    tpu.vector_store %arg7[%c0_10, %c0_11], %13 {strides = array<i32>} : memref<16x128xf32, #tpu.memory_space<vmem>>, vector<16x128xf32>,
    %c7_i32 = arith.constant 7 : i32
    %15 = arith.cmpi eq, %arg2, %c7_i32 : i32
    %16 = arith.extui %15 : i1 to i32
    %c0_i32_12 = arith.constant 0 : i32
    %17 = arith.cmpi ne, %16, %c0_i32_12 : i32
    scf.if %17 {
      %c0_13 = arith.constant 0 : index
      %c0_14 = arith.constant 0 : index
      %18 = vector.load %arg7[%c0_13, %c0_14] : memref<16x128xf32, #tpu.memory_space<vmem>>, vector<16x128xf32>
      %c0_15 = arith.constant 0 : index
      %c0_16 = arith.constant 0 : index
      %19 = vector.load %arg6[%c0_15, %c0_16] : memref<1x128xf32, #tpu.memory_space<vmem>>, vector<1x128xf32>
      %20 = vector.broadcast %19 : vector<1x128xf32> to vector<16x128xf32>
      %21 = arith.addf %18, %20 : vector<16x128xf32>
      %c0_17 = arith.constant 0 : index
      %c0_18 = arith.constant 0 : index
      %22 = vector.load %arg7[%c0_17, %c0_18] : memref<16x128xf32, #tpu.memory_space<vmem>>, vector<16x128xf32>
      tpu.vector_store %arg7[%c0_17, %c0_18], %21 {strides = array<i32>} : memref<16x128xf32, #tpu.memory_space<vmem>>, vector<16x128xf32>,
    } else {
    }
    return
  }
  func.func @transform_0(%arg0: i32, %arg1: i32, %arg2: i32) -> (i32, i32) {
    %c0_i32 = arith.constant 0 : i32
    %c0_i32_0 = arith.constant 0 : i32
    return %arg0, %c0_i32 : i32, i32
  }
  func.func @transform_1(%arg0: i32, %arg1: i32, %arg2: i32) -> (i32, i32, i32) {
    %c0_i32 = arith.constant 0 : i32
    %c0_i32_0 = arith.constant 0 : i32
    return %arg2, %c0_i32, %arg1 : i32, i32, i32
  }
  func.func @transform_2(%arg0: i32, %arg1: i32, %arg2: i32) -> (i32, i32, i32) {
    %c0_i32 = arith.constant 0 : i32
    %c0_i32_0 = arith.constant 0 : i32
    return %arg2, %c0_i32, %arg1 : i32, i32, i32
  }
  func.func @transform_3(%arg0: i32, %arg1: i32, %arg2: i32) -> (i32, i32) {
    %c0_i32 = arith.constant 0 : i32
    %c0_i32_0 = arith.constant 0 : i32
    return %c0_i32, %arg1 : i32, i32
  }
  func.func @transform_4(%arg0: i32, %arg1: i32, %arg2: i32) -> (i32, i32) {
    %c0_i32 = arith.constant 0 : i32
    return %arg0, %arg1 : i32, i32
  }
}

</mosaic_0001>

<llo_original>
// kernel: tpu_custom_call.1
$region0: #{tpu_custom_call.1}
  #allocation0 [shape = 'u32[]', space=smem, size = 0x4, offset = 0x4, fixed_abs, tag = 'smem constant byte address 0x4 - core index']
  #allocation1 [shape = 'u32[144,128]{1,0:T(1,128)}', space=vmem, size = 0x12000, scoped, tag = 'internal scratch']
  %s0 = inlined_call_operand.hbm [shape: bf16[16,32], index: 0, kind: input, shape index: {}]
  %s1 = inlined_call_operand.hbm [shape: s8[8,32,128], index: 1, kind: input, shape index: {}]
  %s2 = inlined_call_operand.hbm [shape: f32[8,1,128], index: 2, kind: input, shape index: {}]
  %s3 = inlined_call_operand.vmem [shape: f32[1,128], index: 3, kind: input, shape index: {}]
  %s4 = inlined_call_operand.hbm [shape: f32[16,128], index: 4, kind: output, shape index: {}]
  %s5 = sld [smem:[#allocation0]]
  $region69: #{tpu_custom_call.1} parent=0
    _
  %s7 = ssub.s32 1, %s5
  %s8 = scalar_select 0, %s7, %s5
  $region1: #{tpu_custom_call.1} parent=0
    #allocation2 [shape = 'u8[4096]{0}', space=vmem, size = 0x1000, scoped, tag = 'input window, operand 0, single buffered']
    #allocation3 [shape = 's32[2]{0}', space=sflag, size = 0x8, scoped, tag = 'scoped memory for tpu_custom_call.1']
    #allocation4 [shape = 's32[2]{0}', space=sflag, size = 0x8, scoped, tag = 'scoped memory for tpu_custom_call.1']
    #allocation5 [shape = 'u8[8192]{0}', space=vmem, size = 0x2000, scoped, tag = 'input window, operand 1']
    #allocation6 [shape = 's32[2]{0}', space=sflag, size = 0x8, scoped, tag = 'scoped memory for tpu_custom_call.1']
    #allocation7 [shape = 'u8[1024]{0}', space=vmem, size = 0x400, scoped, tag = 'input window, operand 2']
    #allocation8 [shape = 'u8[8192]{0}', space=vmem, size = 0x2000, scoped, tag = 'output window, operand 0, single buffered']
    %9 = vsyncpa [#allocation3], 0
    %10 = vsyncpa [#allocation6], 0
    %s11 = scalar_lea.sflag [#allocation6], 1
    %12 = vsyncpa %s11, 0
    %13 = vsyncpa [#allocation4], 0
    loop: start=0, step=1, limit=10
    $region2: #{tpu_custom_call.1} parent=1 // loop_pre_header
      _
    $region3: #{tpu_custom_call.1} parent=1 // loop_header
      %s15 = sphi 0, %s19
      %p16 = scmp.ge.s32.totalorder %s15, 10
      %s22 = sphi 0, %s41
      %s23 = sphi 0, %s37
      %s24 = sphi 0, %s33
      %s25 = sphi 0, %s22
      %s26 = sphi 0, %s23
      %s27 = sphi 0, %s24
      %s28 = sphi 0, %s25
      %s29 = sphi 0, %s26
      %s30 = sphi 0, %s27
      %s44 = sphi 0, %s46
      %s47 = sphi 0, %s44
      %s48 = sphi 0, %s47
      %s64 = sphi 0, %s48
      %s72 = sphi 0, %s74
      %s75 = sphi 0, %s72
      %s76 = sphi 0, %s75
      %s92 = sphi 0, %s76
      %s100 = sphi 0, %s102
      %s103 = sphi 0, %s100
      %s104 = sphi 0, %s103
      %s120 = sphi 0, %s104
      %s126 = sphi 0, %s128
      %s129 = sphi 0, %s126
      %s130 = sphi 0, %s129
      %s146 = sphi 0, %s130
      %s154 = sphi 0, %s156
      %s157 = sphi 0, %s154
      %s158 = sphi 0, %s157
      %s174 = sphi 0, %s158
    $region4: #{tpu_custom_call.1} parent=1 // loop_header_branch
      %18 = sbr.rel (%p16) target = $region8
    $region5: #{tpu_custom_call.1} parent=1 // loop_body
      %s20 = ssub.s32 %s15, 1
      %s21 = ssub.s32 %s15, 2
      %s31 = sadd.s32 1, %s24
      %p32 = scmp.ge.s32.totalorder %s31, 8
      %s33 = scalar_select %p32, 0, %s31
      %s34 = sadd.s32 1, %s23
      %s35 = scalar_select %p32, %s34, %s23
      %p36 = scmp.ge.s32.totalorder %s35, 1
      %s37 = scalar_select %p36, 0, %s35
      %s38 = sadd.s32 1, %s22
      %s39 = scalar_select %p36, %s38, %s22
      %p40 = scmp.ge.s32.totalorder %s39, 1
      %s41 = scalar_select %p40, 0, %s39
      %s42 = ssub.s32 %s22, %s41
      %p43 = scmp.eq.s32.totalorder %s42, 0
      %s45 = sadd.s32 %s44, 1
      %s46 = scalar_select %p43, %s44, %s45
      %p49 = pneg %p43
      %p50 = scmp.eq.s32.totalorder %s15, 7
      %p51 = por %p49, %p50
      %p52 = scmp.ne.s32.totalorder %s44, %s47
      %p53 = scmp.eq.s32.totalorder %s15, 0
      %p54 = por %p52, %p53
      %p55 = scmp.ne.s32.totalorder %s44, %s47
      %p56 = scmp.eq.s32.totalorder %s20, 7
      %p57 = por %p55, %p56
      %p58 = scmp.ne.s32.totalorder %s47, %s48
      %p59 = scmp.eq.s32.totalorder %s20, 0
      %p60 = por %p58, %p59
      %p61 = scmp.ne.s32.totalorder %s47, %s48
      %p62 = scmp.eq.s32.totalorder %s21, 7
      %p63 = por %p61, %p62
      %p65 = scmp.ne.s32.totalorder %s48, %s64
      %p66 = scmp.eq.s32.totalorder %s21, 0
      %p67 = por %p65, %p66
      %s68 = ssub.s32 %s24, %s33
      %s69 = ssub.s32 %s23, %s37
      %s70 = sor.u32 %s68, %s69
      %p71 = scmp.eq.s32.totalorder %s70, 0
      %s73 = sadd.s32 %s72, 1
      %s74 = scalar_select %p71, %s72, %s73
      %p77 = pneg %p71
      %p78 = scmp.eq.s32.totalorder %s15, 7
      %p79 = por %p77, %p78
      %p80 = scmp.ne.s32.totalorder %s72, %s75
      %p81 = scmp.eq.s32.totalorder %s15, 0
      %p82 = por %p80, %p81
      %p83 = scmp.ne.s32.totalorder %s72, %s75
      %p84 = scmp.eq.s32.totalorder %s20, 7
      %p85 = por %p83, %p84
      %p86 = scmp.ne.s32.totalorder %s75, %s76
      %p87 = scmp.eq.s32.totalorder %s20, 0
      %p88 = por %p86, %p87
      %p89 = scmp.ne.s32.totalorder %s75, %s76
      %p90 = scmp.eq.s32.totalorder %s21, 7
      %p91 = por %p89, %p90
      %p93 = scmp.ne.s32.totalorder %s76, %s92
      %p94 = scmp.eq.s32.totalorder %s21, 0
      %p95 = por %p93, %p94
      %s96 = ssub.s32 %s24, %s33
      %s97 = ssub.s32 %s23, %s37
      %s98 = sor.u32 %s96, %s97
      %p99 = scmp.eq.s32.totalorder %s98, 0
      %s101 = sadd.s32 %s100, 1
      %s102 = scalar_select %p99, %s100, %s101
      %p105 = pneg %p99
      %p106 = scmp.eq.s32.totalorder %s15, 7
      %p107 = por %p105, %p106
      %p108 = scmp.ne.s32.totalorder %s100, %s103
      %p109 = scmp.eq.s32.totalorder %s15, 0
      %p110 = por %p108, %p109
      %p111 = scmp.ne.s32.totalorder %s100, %s103
      %p112 = scmp.eq.s32.totalorder %s20, 7
      %p113 = por %p111, %p112
      %p114 = scmp.ne.s32.totalorder %s103, %s104
      %p115 = scmp.eq.s32.totalorder %s20, 0
      %p116 = por %p114, %p115
      %p117 = scmp.ne.s32.totalorder %s103, %s104
      %p118 = scmp.eq.s32.totalorder %s21, 7
      %p119 = por %p117, %p118
      %p121 = scmp.ne.s32.totalorder %s104, %s120
      %p122 = scmp.eq.s32.totalorder %s21, 0
      %p123 = por %p121, %p122
      %s124 = ssub.s32 %s23, %s37
      %p125 = scmp.eq.s32.totalorder %s124, 0
      %s127 = sadd.s32 %s126, 1
      %s128 = scalar_select %p125, %s126, %s127
      %p131 = pneg %p125
      %p132 = scmp.eq.s32.totalorder %s15, 7
      %p133 = por %p131, %p132
      %p134 = scmp.ne.s32.totalorder %s126, %s129
      %p135 = scmp.eq.s32.totalorder %s15, 0
      %p136 = por %p134, %p135
      %p137 = scmp.ne.s32.totalorder %s126, %s129
      %p138 = scmp.eq.s32.totalorder %s20, 7
      %p139 = por %p137, %p138
      %p140 = scmp.ne.s32.totalorder %s129, %s130
      %p141 = scmp.eq.s32.totalorder %s20, 0
      %p142 = por %p140, %p141
      %p143 = scmp.ne.s32.totalorder %s129, %s130
      %p144 = scmp.eq.s32.totalorder %s21, 7
      %p145 = por %p143, %p144
      %p147 = scmp.ne.s32.totalorder %s130, %s146
      %p148 = scmp.eq.s32.totalorder %s21, 0
      %p149 = por %p147, %p148
      %s150 = ssub.s32 %s22, %s41
      %s151 = ssub.s32 %s23, %s37
      %s152 = sor.u32 %s150, %s151
      %p153 = scmp.eq.s32.totalorder %s152, 0
      %s155 = sadd.s32 %s154, 1
      %s156 = scalar_select %p153, %s154, %s155
      %p159 = pneg %p153
      %p160 = scmp.eq.s32.totalorder %s15, 7
      %p161 = por %p159, %p160
      %p162 = scmp.ne.s32.totalorder %s154, %s157
      %p163 = scmp.eq.s32.totalorder %s15, 0
      %p164 = por %p162, %p163
      %p165 = scmp.ne.s32.totalorder %s154, %s157
      %p166 = scmp.eq.s32.totalorder %s20, 7
      %p167 = por %p165, %p166
      %p168 = scmp.ne.s32.totalorder %s157, %s158
      %p169 = scmp.eq.s32.totalorder %s20, 0
      %p170 = por %p168, %p169
      %p171 = scmp.ne.s32.totalorder %s157, %s158
      %p172 = scmp.eq.s32.totalorder %s21, 7
      %p173 = por %p171, %p172
      %p175 = scmp.ne.s32.totalorder %s158, %s174
      %p176 = scmp.eq.s32.totalorder %s21, 0
      %p177 = por %p175, %p176
      %p178 = scmp.le.s32.totalorder 1, %s15
      %p179 = scmp.lt.s32.totalorder %s15, 9
      %p180 = pnand %p178, %p179
      %p181 = pneg %p180
      // Predicated region
      $region9: #{tpu_custom_call.1} parent=5 // pred_check
        _
      $region10: #{tpu_custom_call.1} parent=5 // pred_check_branch
        %183 = sbr.rel (%p180) target = $region12
      $region11: #{tpu_custom_call.1} parent=5 // pred_region
        %s184 = ssub.s32 %s15, 1
        // Predicated region
        $region13: #{tpu_custom_call.1} parent=11 // pred_check
          %p185 = pneg %p60
        $region14: #{tpu_custom_call.1} parent=11 // pred_check_branch
          %187 = sbr.rel (%p185) target = $region16
        $region15: #{tpu_custom_call.1} parent=11 // pred_region
          %s188 = smul.u32 2, %s25
          %s190 = ssub.s32 128, 128
          %191 = vsyncadd [#allocation3], %s190
          %s192 = smul.addr %s188, 64
          %s193 = scalar_lea.hbm %s0, %s192
          %s194 = sshll.u32 [#allocation2], 4
          %s195 = int_to_ptr.vmem [resolvable:$true] %s194
          %200 = dma.hbm_to_vmem [thread:$0]  %s193, 128, %s195, [#allocation3], 64, 64, 4
        $region16: #{tpu_custom_call.1} parent=11 // pred_fallthru
          _
        // Predicated region
        $region17: #{tpu_custom_call.1} parent=11 // pred_check
          %p201 = pneg %p142
        $region18: #{tpu_custom_call.1} parent=11 // pred_check_branch
          %203 = sbr.rel (%p201) target = $region20
        $region19: #{tpu_custom_call.1} parent=11 // pred_region
          %p204 = scmp.lt.s32.totalorder %s26, 0
          %s205 = scalar_select %p204, %s26, 0
          %s206 = scalar_lea.vmem %s3, %s205
        $region20: #{tpu_custom_call.1} parent=11 // pred_fallthru
          _
      $region12: #{tpu_custom_call.1} parent=5 // pred_fallthru
        _
      %p207 = scmp.lt.s32.totalorder %s15, 8
      // Predicated region
      $region21: #{tpu_custom_call.1} parent=5 // pred_check
        %p208 = pneg %p207
      $region22: #{tpu_custom_call.1} parent=5 // pred_check_branch
        %210 = sbr.rel (%p208) target = $region24
      $region23: #{tpu_custom_call.1} parent=5 // pred_region
        // Predicated region
        $region25: #{tpu_custom_call.1} parent=23 // pred_check
          %p211 = pneg %p82
        $region26: #{tpu_custom_call.1} parent=23 // pred_check_branch
          %213 = sbr.rel (%p211) target = $region28
        $region27: #{tpu_custom_call.1} parent=23 // pred_region
          %s214 = sand.u32 %s15, 1
          %s215 = scalar_lea.sflag [#allocation6], %s214
          %s216 = sand.u32 %s72, 1
          %s217 = smul.addr %s216, 8
          %s218 = scalar_lea.vmem [#allocation5], %s217
          %s220 = ssub.s32 128, 128
          %221 = vsyncadd %s215, %s220
          %s222 = sadd.s32 %s23, %s24
          %s223 = smul.addr %s222, 128
          %s224 = scalar_lea.hbm %s1, %s223
          %s226 = sshll.u32 %s218, 4
          %s227 = int_to_ptr.vmem [resolvable:$true] %s226
          %229 = dma.hbm_to_vmem [thread:$0]  %s224, 128, %s227, %s215
        $region28: #{tpu_custom_call.1} parent=23 // pred_fallthru
          _
        // Predicated region
        $region29: #{tpu_custom_call.1} parent=23 // pred_check
          %p230 = pneg %p110
        $region30: #{tpu_custom_call.1} parent=23 // pred_check_branch
          %232 = sbr.rel (%p230) target = $region32
        $region31: #{tpu_custom_call.1} parent=23 // pred_region
          %s233 = sand.u32 %s15, 1
          %s234 = scalar_lea.sflag [#allocation6], %s233
          %s235 = sand.u32 %s100, 1
          %s236 = scalar_lea.vmem [#allocation7], %s235
          %s238 = ssub.s32 16, 16
          %239 = vsyncadd %s234, %s238
          %s240 = sadd.s32 %s23, %s24
          %s241 = smul.addr %s240, 16
          %s242 = scalar_lea.hbm %s2, %s241
          %s244 = sshll.u32 %s236, 4
          %s245 = int_to_ptr.vmem [resolvable:$true] %s244
          %247 = dma.hbm_to_vmem [thread:$0]  %s242, 16, %s245, %s234
        $region32: #{tpu_custom_call.1} parent=23 // pred_fallthru
          _
      $region24: #{tpu_custom_call.1} parent=5 // pred_fallthru
        _
      %p248 = scmp.le.s32.totalorder 1, %s15
      %p249 = scmp.lt.s32.totalorder %s15, 9
      %p250 = pnand %p248, %p249
      %p251 = pneg %p250
      // Predicated region
      $region33: #{tpu_custom_call.1} parent=5 // pred_check
        _
      $region34: #{tpu_custom_call.1} parent=5 // pred_check_branch
        %253 = sbr.rel (%p250) target = $region36
      $region35: #{tpu_custom_call.1} parent=5 // pred_region
        %s254 = ssub.s32 %s15, 1
        // Predicated region
        $region37: #{tpu_custom_call.1} parent=35 // pred_check
          %p255 = pneg %p60
        $region38: #{tpu_custom_call.1} parent=35 // pred_check_branch
          %257 = sbr.rel (%p255) target = $region40
        $region39: #{tpu_custom_call.1} parent=35 // pred_region
          %258 = dma.done [#allocation3], 128
        $region40: #{tpu_custom_call.1} parent=35 // pred_fallthru
          _
        %s259 = sand.u32 %s20, 1
        %s260 = scalar_lea.sflag [#allocation6], %s259
        %s261 = sand.u32 %s75, 1
        %s262 = smul.addr %s261, 8
        %s263 = scalar_lea.vmem [#allocation5], %s262
        // Predicated region
        $region41: #{tpu_custom_call.1} parent=35 // pred_check
          %p264 = pneg %p88
        $region42: #{tpu_custom_call.1} parent=35 // pred_check_branch
          %266 = sbr.rel (%p264) target = $region44
        $region43: #{tpu_custom_call.1} parent=35 // pred_region
          %267 = dma.done %s260, 128
        $region44: #{tpu_custom_call.1} parent=35 // pred_fallthru
          _
        %s268 = sand.u32 %s20, 1
        %s269 = scalar_lea.sflag [#allocation6], %s268
        %s270 = sand.u32 %s103, 1
        %s271 = scalar_lea.vmem [#allocation7], %s270
        // Predicated region
        $region45: #{tpu_custom_call.1} parent=35 // pred_check
          %p272 = pneg %p116
        $region46: #{tpu_custom_call.1} parent=35 // pred_check_branch
          %274 = sbr.rel (%p272) target = $region48
        $region47: #{tpu_custom_call.1} parent=35 // pred_region
          %275 = dma.done %s269, 16
        $region48: #{tpu_custom_call.1} parent=35 // pred_fallthru
          _
        %p276 = pneg %p60
        %p277 = pneg %p57
        %s278 = sand.u32 %s20, 1
        %s279 = scalar_lea.sflag [#allocation6], %s278
        %s280 = sand.u32 %s75, 1
        %s281 = smul.addr %s280, 8
        %s282 = scalar_lea.vmem [#allocation5], %s281
        %p283 = pneg %p88
        %p284 = pneg %p85
        %s285 = sand.u32 %s20, 1
        %s286 = scalar_lea.sflag [#allocation6], %s285
        %s287 = sand.u32 %s103, 1
        %s288 = scalar_lea.vmem [#allocation7], %s287
        %p289 = pneg %p116
        %p290 = pneg %p113
        %p291 = scmp.lt.s32.totalorder %s26, 0
        %s292 = scalar_select %p291, %s26, 0
        %s293 = scalar_lea.vmem %s3, %s292
        %p294 = pneg %p142
        %p295 = pneg %p139
        %p296 = pneg %p170
        %p297 = pneg %p167
        %s298 = smul.u32 2, %s25
        %p299 = scmp.lt.s32.totalorder %s26, 0
        %s300 = scalar_select %p299, %s26, 0
        %s301 = scalar_lea.vmem %s3, %s300
        %s302 = smul.u32 2, %s25
        %p304 = scmp.eq.s32.totalorder %s27, 0
        // Predicated region
        $region49: #{tpu_custom_call.1} parent=35 // pred_check
          %p305 = pneg %p304
        $region50: #{tpu_custom_call.1} parent=35 // pred_check_branch
          %307 = sbr.rel (%p305) target = $region52
        $region51: #{tpu_custom_call.1} parent=35 // pred_region
          %308 = vst [vmem:[#allocation8] sm:$0xff] 0.0
          %309 = vst [vmem:[#allocation8 + $0x8] sm:$0xff] 0.0
        $region52: #{tpu_custom_call.1} parent=35 // pred_fallthru
          _
        %v310 = vld [vmem:[#allocation2] sm:$0xf]
        %v311 = vld [vmem:[#allocation2 + $0x4] sm:$0xf]
        %v312 = vld [vmem:[%s263] sm:$0xff]
        %v313 = vunpack.c.l.s8.bf16 %v312
        %v314 = vunpack.c.h.s8.bf16 %v312
        %v317 = vunpack.c.l.b16 %v310
        %v318 = vunpack.c.l.b16 %v311
        %v319 = vpack.c.b16 %v318, %v317
        %vm320 = vcmask 261120
        %v322 = vsel %vm320, %v319, 0
        %324 = vmatprep.subr.bf16.mxu0 0
        %325 = vmatpush1.bf16.msra.mxu0 0
        %326 = vmatprep.subr.bf16.mxu0 0
        %327 = vmatpush1.bf16.msra.mxu0 0
        %328 = vmatprep.subr.bf16.mxu0 0
        %329 = vmatpush1.bf16.msra.mxu0 0
        %330 = vmatprep.subr.bf16.mxu0 0
        %331 = vmatpush1.bf16.msra.mxu0 0
        %332 = vmatprep.subr.bf16.mxu0 0
        %333 = vmatpush1.bf16.msra.mxu0 0
        %334 = vmatprep.subr.bf16.mxu0 0
        %335 = vmatpush1.bf16.msra.mxu0 0
        %336 = vmatprep.subr.bf16.mxu0 0
        %337 = vmatpush1.bf16.msra.mxu0 %v314
        %338 = vmatprep.subr.bf16.mxu0 0
        %339 = vmatpush1.bf16.msra.mxu0 %v313
        %340 = vmatprep.subr.bf16.mxu0 0
        %341 = vmatpush2.bf16.msra.mxu0 0
        %342 = vmatprep.subr.bf16.mxu0 0
        %343 = vmatpush2.bf16.msra.mxu0 0
        %344 = vmatprep.subr.bf16.mxu0 0
        %345 = vmatpush2.bf16.msra.mxu0 0
        %346 = vmatprep.subr.bf16.mxu0 0
        %347 = vmatpush2.bf16.msra.mxu0 0
        %348 = vmatprep.subr.bf16.mxu0 0
        %349 = vmatpush2.bf16.msra.mxu0 0
        %350 = vmatprep.subr.bf16.mxu0 0
        %351 = vmatpush2.bf16.msra.mxu0 0
        %352 = vmatprep.subr.bf16.mxu0 0
        %353 = vmatpush2.bf16.msra.mxu0 0
        %354 = vmatprep.subr.bf16.mxu0 0
        %355 = vmatpush2.bf16.msra.mxu0 0
        %356 = vmatprep.mubr.bf16.mxu0 0
        %357 = vmatmul.mubr.bf16.gmra.mxu0 %v322
        %v358 = vpop.f32.mrf.mxu0
        %v359 = vadd.f32 0.0, %v358
        %v360 = vpop.f32.mrf.mxu0
        %v361 = vpop.f32.mrf.mxu0
        %v362 = vadd.f32 0.0, %v361
        %v363 = vpop.f32.mrf.mxu0
        %364 = vdwg.mxu0
        %v365 = vld [vmem:[#allocation8] sm:$0xff]
        %v366 = vld [vmem:[#allocation8 + $0x8] sm:$0xff]
        %v367 = vld [vmem:[%s271] sm:$0x1]
        %v369 = vlaneseq
        %v370 = vshrl.u32 %v369, 7
        %v371 = vsub.s32 0, %v370
        %v372 = vrot.slane %v367, %v371
        %v374 = vmul.f32 %v359, %v372
        %v375 = vmul.f32 %v362, %v372
        %v376 = vadd.f32 %v365, %v374
        %v377 = vadd.f32 %v366, %v375
        %378 = vst [vmem:[#allocation8] sm:$0xff] %v376
        %379 = vst [vmem:[#allocation8 + $0x8] sm:$0xff] %v377
        %p380 = scmp.eq.s32.totalorder %s27, 7
        // Predicated region
        $region53: #{tpu_custom_call.1} parent=35 // pred_check
          %p381 = pneg %p380
        $region54: #{tpu_custom_call.1} parent=35 // pred_check_branch
          %383 = sbr.rel (%p381) target = $region56
        $region55: #{tpu_custom_call.1} parent=35 // pred_region
          %v384 = vld [vmem:[#allocation8] sm:$0xff]
          %v385 = vld [vmem:[#allocation8 + $0x8] sm:$0xff]
          %v386 = vld [vmem:[%s301] sm:$0x1]
          %v388 = vlaneseq
          %v389 = vshrl.u32 %v388, 7
          %v390 = vsub.s32 0, %v389
          %v391 = vrot.slane %v386, %v390
          %v393 = vadd.f32 %v384, %v391
          %v394 = vadd.f32 %v385, %v391
          %395 = vst [vmem:[#allocation8] sm:$0xff] %v393
          %396 = vst [vmem:[#allocation8 + $0x8] sm:$0xff] %v394
        $region56: #{tpu_custom_call.1} parent=35 // pred_fallthru
          _
        // Predicated region
        $region57: #{tpu_custom_call.1} parent=35 // pred_check
          %p397 = pneg %p167
        $region58: #{tpu_custom_call.1} parent=35 // pred_check_branch
          %399 = sbr.rel (%p397) target = $region60
        $region59: #{tpu_custom_call.1} parent=35 // pred_region
          %s400 = smul.u32 2, %s25
          %s402 = ssub.s32 256, 256
          %403 = vsyncadd [#allocation4], %s402
          %s404 = sadd.s32 %s26, %s400
          %s405 = smul.addr %s404, 128
          %s406 = scalar_lea.hbm %s4, %s405
          %s407 = sshll.u32 [#allocation8], 4
          %s408 = int_to_ptr.vmem [resolvable:$true] %s407
          %413 = dma.vmem_to_hbm [thread:$0]  %s408, 256, %s406, [#allocation4], 128, 128, 8
        $region60: #{tpu_custom_call.1} parent=35 // pred_fallthru
          _
        // Predicated region
        $region61: #{tpu_custom_call.1} parent=35 // pred_check
          %p414 = pneg %p167
        $region62: #{tpu_custom_call.1} parent=35 // pred_check_branch
          %416 = sbr.rel (%p414) target = $region64
        $region63: #{tpu_custom_call.1} parent=35 // pred_region
          %417 = dma.done [#allocation4], 256
        $region64: #{tpu_custom_call.1} parent=35 // pred_fallthru
          _
      $region36: #{tpu_custom_call.1} parent=5 // pred_fallthru
        _
      %p418 = scmp.le.s32.totalorder 2, %s15
      // Predicated region
      $region65: #{tpu_custom_call.1} parent=5 // pred_check
        %p419 = pneg %p418
      $region66: #{tpu_custom_call.1} parent=5 // pred_check_branch
        %421 = sbr.rel (%p419) target = $region68
      $region67: #{tpu_custom_call.1} parent=5 // pred_region
        %s422 = ssub.s32 %s15, 2
      $region68: #{tpu_custom_call.1} parent=5 // pred_fallthru
        _
    $region6: #{tpu_custom_call.1} parent=1 // loop_footer
      %s19 = sadd.s32 1, %s15
    $region7: #{tpu_custom_call.1} parent=1 // loop_footer_branch
      %14 = sbr.rel target = $region3
    $region8: #{tpu_custom_call.1} parent=1 // loop_exit
      _
    %423 = vsyncpa [#allocation3], 1
    %s424 = scalar_lea.sflag [#allocation3], 1
    %425 = vsyncpa %s424, 1
    %426 = vsyncpa [#allocation6], 1
    %s427 = scalar_lea.sflag [#allocation6], 1
    %428 = vsyncpa %s427, 1
    %429 = vsyncpa [#allocation4], 1
    %s430 = scalar_lea.sflag [#allocation4], 1
    %431 = vsyncpa %s430, 1

</llo_original>
